<compile_context>
chip_gen: v7x
topology: tpu7x:2x2x1
jax: 0.10.0
libtpu: 0.0.40
codegen_flags: <defaults>
</compile_context>

<pallas_src>
import functools

import jax
import jax.numpy as jnp
from jax.experimental import pallas as pl
from jax.experimental.pallas import tpu as pltpu

LN_EPS = 1e-5
_INV_SQRT2 = 0.7071067811865476
_SQRT_2_OVER_PI = 0.7978845608028654
LANE = 128   # lane width; padded width of hidden-2 and of the output
H1 = 128     # first hidden layer width (already lane aligned)


def _round_up(n, m):
    return ((n + m - 1) // m) * m


def _gelu_exact(x):
    # PyTorch nn.GELU() default (approximate='none'): 0.5*x*(1+erf(x/sqrt(2)))
    return 0.5 * x * (1.0 + jax.lax.erf(x * _INV_SQRT2))


def _gelu_tanh(x):
    # Opt-in tanh approximation (runs on the EUP instead of the VALU).
    return 0.5 * x * (1.0 + jnp.tanh(_SQRT_2_OVER_PI * (x + 0.044715 * x * x * x)))


def _trend_kernel(x_ref, w1_ref, vec_ref, w23_ref, o_ref, *, approx_gelu=False):
    gelu = _gelu_tanh if approx_gelu else _gelu_exact

    # Packed (8,128) vector block: rows 0..4 = b1, gamma, beta, b2, b3.
    b1 = vec_ref[0:1, :]
    g = vec_ref[1:2, :]
    beta = vec_ref[2:3, :]
    b2 = vec_ref[3:4, :]
    b3 = vec_ref[4:5, :]

    x = x_ref[...]

    # Linear(state_dim, 128) + GELU
    h = jnp.dot(x, w1_ref[...], preferred_element_type=jnp.float32) + b1
    h = gelu(h)

    # LayerNorm(128)
    mean = jnp.mean(h, axis=-1, keepdims=True)
    cent = h - mean
    var = jnp.mean(cent * cent, axis=-1, keepdims=True)
    h = cent * jax.lax.rsqrt(var + LN_EPS) * g + beta

    # Linear(128, 64 -> zero-padded to 128) + GELU  (padded cols stay exactly 0)
    h = jnp.dot(h, w23_ref[0], preferred_element_type=jnp.float32) + b2
    h = gelu(h)

    # Linear(64 -> 128 zero rows, action_dim -> zero-padded to 128) + Tanh * 1.2
    h = jnp.dot(h, w23_ref[1], preferred_element_type=jnp.float32) + b3
    o_ref[...] = (jnp.tanh(h) * 1.2).astype(o_ref.dtype)


def _choose_block_b(B):
    """Batch tile size (always a multiple of 8)."""
    b8 = _round_up(B, 8)
    if b8 < 512:
        # Latency path: whole batch in one grid step.
        return b8
    if b8 <= 8192:
        # ~4 grid steps: enables DMA/compute/writeback overlap and keeps both
        # v7x TensorCores busy, while step overhead stays negligible.
        return _round_up(-(-b8 // 4), 8)
    # Large batches: 2048-row tiles (>= 5 steps; ~2.5 MiB double-buffered VMEM).
    return 2048


@functools.partial(jax.jit, static_argnames=("action_dim", "block_b", "approx_gelu"))
def trend_following_forward(x, padded_params, action_dim, block_b=None,
                            approx_gelu=False):
    """x: (B, state_dim) float32.  padded_params from pad_params_for_kernel.
    Returns (B, action_dim) float32."""
    B, S = x.shape
    p = padded_params

    if block_b is None:
        block_b = _choose_block_b(B)
    grid = (pl.cdiv(B, block_b),)

    full2 = lambda i: (0, 0)
    full3 = lambda i: (0, 0, 0)

    # Advisory cost estimate for the XLA scheduler.
    flops = 2 * B * (S * H1 + H1 * LANE + LANE * LANE)
    transcendentals = B * (H1 + 2 * LANE)          # 2x GELU + final tanh
    bytes_accessed = 4 * (B * S + p["w1"].size + p["vecs"].size
                          + p["w23"].size + B * LANE)

    out = pl.pallas_call(
        functools.partial(_trend_kernel, approx_gelu=approx_gelu),
        out_shape=jax.ShapeDtypeStruct((B, LANE), jnp.float32),
        grid=grid,
        in_specs=[
            pl.BlockSpec((block_b, S), lambda i: (i, 0)),   # x tile over batch
            pl.BlockSpec(p["w1"].shape, full2),             # (S, 128)
            pl.BlockSpec(p["vecs"].shape, full2),           # (8, 128)  packed vectors
            pl.BlockSpec(p["w23"].shape, full3),            # (2, 128, 128) packed mats
        ],
        out_specs=pl.BlockSpec((block_b, LANE), lambda i: (i, 0)),
        compiler_params=pltpu.CompilerParams(
            dimension_semantics=("parallel",)),
        cost_estimate=pl.CostEstimate(flops=flops,
                                      transcendentals=transcendentals,
                                      bytes_accessed=bytes_accessed),
    )(x, p["w1"], p["vecs"], p["w23"])

    return out[:, :action_dim]


def init_params(key, state_dim, action_dim):
    """Unpadded params mimicking PyTorch nn.Linear default init U(-1/sqrt(in), 1/sqrt(in))."""
    ks = jax.random.split(key, 6)

    def lin(kw, kb, fan_in, fan_out):
        bound = 1.0 / jnp.sqrt(float(fan_in))
        w = jax.random.uniform(kw, (fan_in, fan_out), jnp.float32, -bound, bound)
        b = jax.random.uniform(kb, (1, fan_out), jnp.float32, -bound, bound)
        return w, b

    w1, b1 = lin(ks[0], ks[1], state_dim, 128)
    w2, b2 = lin(ks[2], ks[3], 128, 64)
    w3, b3 = lin(ks[4], ks[5], 64, action_dim)
    return {
        "w1": w1, "b1": b1,
        "g": jnp.ones((1, 128), jnp.float32),      # LayerNorm gamma
        "beta": jnp.zeros((1, 128), jnp.float32),  # LayerNorm beta
        "w2": w2, "b2": b2,
        "w3": w3, "b3": b3,
    }


def pad_params_for_kernel(p):
    """Zero-pad the 64-wide and action_dim-wide layers to 128 lanes (exact) and
    pack vectors / matrices into single DMA blocks."""
    h2 = p["w2"].shape[1]          # 64
    a = p["w3"].shape[1]           # action_dim
    assert p["w1"].shape[1] == H1 and p["w2"].shape[0] == H1, "hidden-1 must be 128"
    assert p["w3"].shape[0] == h2, "w3 fan-in must match hidden-2"
    assert h2 <= LANE, f"hidden-2 ({h2}) must be <= {LANE}"
    assert a <= LANE, f"action_dim ({a}) must be <= {LANE}"

    w2 = jnp.pad(p["w2"], ((0, 0), (0, LANE - h2)))
    b2 = jnp.pad(p["b2"], ((0, 0), (0, LANE - h2)))
    w3 = jnp.pad(p["w3"], ((0, LANE - h2), (0, LANE - a)))
    b3 = jnp.pad(p["b3"], ((0, 0), (0, LANE - a)))

    # One (8,128) block: rows = [b1, gamma, beta, b2, b3, 0, 0, 0]
    vecs = jnp.concatenate(
        [p["b1"], p["g"], p["beta"], b2, b3, jnp.zeros((3, LANE), jnp.float32)],
        axis=0)
    # One (2,128,128) block: [w2_padded, w3_padded]
    w23 = jnp.stack([w2, w3], axis=0)

    return {"w1": p["w1"], "vecs": vecs, "w23": w23}


def reference_forward(x, p):
    """Plain-JAX reference (matches PyTorch semantics), uses unpadded params."""
    h = jax.nn.gelu(x @ p["w1"] + p["b1"], approximate=False)
    mean = jnp.mean(h, axis=-1, keepdims=True)
    var = jnp.mean((h - mean) ** 2, axis=-1, keepdims=True)
    h = (h - mean) / jnp.sqrt(var + LN_EPS) * p["g"] + p["beta"]
    h = jax.nn.gelu(h @ p["w2"] + p["b2"], approximate=False)
    h = h @ p["w3"] + p["b3"]
    return jnp.tanh(h) * 1.2


if __name__ == "__main__":
    state_dim, action_dim = 32, 8
    batch = 16

    key = jax.random.PRNGKey(0)
    k_x, k_p = jax.random.split(key)
    x = jax.random.normal(k_x, (batch, state_dim), jnp.float32)
    params = init_params(k_p, state_dim, action_dim)
    kernel_params = pad_params_for_kernel(params)

    out = trend_following_forward(x, kernel_params, action_dim)
    out = jax.block_until_ready(out)

    ref = reference_forward(x, params)
    assert out.shape == (batch, action_dim)
    assert jnp.allclose(out, ref, atol=1e-4, rtol=1e-4), "mismatch vs reference"
    print("KERNEL_OK")
</pallas_src>

<mosaic_0001>
module attributes {stable_mosaic.version = 11 : i64} {
  func.func @_trend_kernel(%arg0: i32, %arg1: memref<16x32xf32, #tpu.memory_space<vmem>>, %arg2: memref<32x128xf32, #tpu.memory_space<vmem>>, %arg3: memref<8x128xf32, #tpu.memory_space<vmem>>, %arg4: memref<2x128x128xf32, #tpu.memory_space<vmem>>, %arg5: memref<16x128xf32, #tpu.memory_space<vmem>>) attributes {dimension_semantics = [#tpu.dimension_semantics<parallel>], iteration_bounds = array<i64: 1>, scalar_prefetch = 0 : i64, scratch_operands = 0 : i64, tpu.core_type = #tpu.core_type<tc>, window_params = [{transform_indices = @transform_0, window_bounds = array<i64: 16, 32>}, {pipeline_mode = #tpu.pipeline_mode<synchronous>, transform_indices = @transform_1, window_bounds = array<i64: 32, 128>}, {pipeline_mode = #tpu.pipeline_mode<synchronous>, transform_indices = @transform_2, window_bounds = array<i64: 8, 128>}, {pipeline_mode = #tpu.pipeline_mode<synchronous>, transform_indices = @transform_3, window_bounds = array<i64: 2, 128, 128>}, {transform_indices = @transform_4, window_bounds = array<i64: 16, 128>}]} {
    %c0 = arith.constant 0 : index
    %c0_0 = arith.constant 0 : index
    %0 = vector.load %arg3[%c0, %c0_0] : memref<8x128xf32, #tpu.memory_space<vmem>>, vector<1x128xf32>
    %c1 = arith.constant 1 : index
    %c0_1 = arith.constant 0 : index
    %1 = vector.load %arg3[%c1, %c0_1] : memref<8x128xf32, #tpu.memory_space<vmem>>, vector<1x128xf32>
    %c2 = arith.constant 2 : index
    %c0_2 = arith.constant 0 : index
    %2 = vector.load %arg3[%c2, %c0_2] : memref<8x128xf32, #tpu.memory_space<vmem>>, vector<1x128xf32>
    %c3 = arith.constant 3 : index
    %c0_3 = arith.constant 0 : index
    %3 = vector.load %arg3[%c3, %c0_3] : memref<8x128xf32, #tpu.memory_space<vmem>>, vector<1x128xf32>
    %c4 = arith.constant 4 : index
    %c0_4 = arith.constant 0 : index
    %4 = vector.load %arg3[%c4, %c0_4] : memref<8x128xf32, #tpu.memory_space<vmem>>, vector<1x128xf32>
    %c0_5 = arith.constant 0 : index
    %c0_6 = arith.constant 0 : index
    %5 = vector.load %arg1[%c0_5, %c0_6] : memref<16x32xf32, #tpu.memory_space<vmem>>, vector<16x32xf32>
    %c0_7 = arith.constant 0 : index
    %c0_8 = arith.constant 0 : index
    %6 = vector.load %arg2[%c0_7, %c0_8] : memref<32x128xf32, #tpu.memory_space<vmem>>, vector<32x128xf32>
    %cst = arith.constant dense<0.000000e+00> : vector<16x128xf32>
    %7 = tpu.matmul %5, %6, %cst {dimension_numbers = #tpu.dot_dimension_numbers<[1], [0], [0], [1], [0, 0, 1, 1], [], []>} : vector<16x32xf32>, vector<32x128xf32>, vector<16x128xf32> -> vector<16x128xf32>
    %8 = vector.broadcast %0 : vector<1x128xf32> to vector<16x128xf32>
    %9 = arith.addf %7, %8 : vector<16x128xf32>
    %cst_9 = arith.constant 5.000000e-01 : f32
    %10 = vector.broadcast %cst_9 : f32 to vector<16x128xf32>
    %11 = arith.mulf %10, %9 : vector<16x128xf32>
    %cst_10 = arith.constant 0.707106769 : f32
    %12 = vector.broadcast %cst_10 : f32 to vector<16x128xf32>
    %13 = arith.mulf %9, %12 : vector<16x128xf32>
    %14 = math.erf %13 : vector<16x128xf32>
    %cst_11 = arith.constant 1.000000e+00 : f32
    %15 = vector.broadcast %cst_11 : f32 to vector<16x128xf32>
    %16 = arith.addf %15, %14 : vector<16x128xf32>
    %17 = arith.mulf %11, %16 : vector<16x128xf32>
    %cst_12 = arith.constant dense<0.000000e+00> : vector<16xf32>
    %18 = vector.multi_reduction <add>, %17, %cst_12 [1] : vector<16x128xf32> to vector<16xf32>
    %19 = vector.shape_cast %18 : vector<16xf32> to vector<16x1xf32>
    %cst_13 = arith.constant 1.280000e+02 : f32
    %20 = vector.broadcast %cst_13 : f32 to vector<16x1xf32>
    %21 = arith.divf %19, %20 : vector<16x1xf32>
    %22 = vector.broadcast %21 : vector<16x1xf32> to vector<16x128xf32>
    %23 = arith.subf %17, %22 : vector<16x128xf32>
    %24 = arith.mulf %23, %23 : vector<16x128xf32>
    %cst_14 = arith.constant dense<0.000000e+00> : vector<16xf32>
    %25 = vector.multi_reduction <add>, %24, %cst_14 [1] : vector<16x128xf32> to vector<16xf32>
    %26 = vector.shape_cast %25 : vector<16xf32> to vector<16x1xf32>
    %cst_15 = arith.constant 1.280000e+02 : f32
    %27 = vector.broadcast %cst_15 : f32 to vector<16x1xf32>
    %28 = arith.divf %26, %27 : vector<16x1xf32>
    %cst_16 = arith.constant 9.99999974E-6 : f32
    %29 = vector.broadcast %cst_16 : f32 to vector<16x1xf32>
    %30 = arith.addf %28, %29 : vector<16x1xf32>
    %31 = math.rsqrt %30 : vector<16x1xf32>
    %32 = vector.broadcast %31 : vector<16x1xf32> to vector<16x128xf32>
    %33 = arith.mulf %23, %32 : vector<16x128xf32>
    %34 = vector.broadcast %1 : vector<1x128xf32> to vector<16x128xf32>
    %35 = arith.mulf %33, %34 : vector<16x128xf32>
    %36 = vector.broadcast %2 : vector<1x128xf32> to vector<16x128xf32>
    %37 = arith.addf %35, %36 : vector<16x128xf32>
    %c0_17 = arith.constant 0 : index
    %c0_18 = arith.constant 0 : index
    %c0_19 = arith.constant 0 : index
    %38 = vector.load %arg4[%c0_17, %c0_18, %c0_19] : memref<2x128x128xf32, #tpu.memory_space<vmem>>, vector<1x128x128xf32>
    %39 = vector.shape_cast %38 : vector<1x128x128xf32> to vector<128x128xf32>
    %cst_20 = arith.constant dense<0.000000e+00> : vector<16x128xf32>
    %40 = tpu.matmul %37, %39, %cst_20 {dimension_numbers = #tpu.dot_dimension_numbers<[1], [0], [0], [1], [0, 0, 1, 1], [], []>} : vector<16x128xf32>, vector<128x128xf32>, vector<16x128xf32> -> vector<16x128xf32>
    %41 = vector.broadcast %3 : vector<1x128xf32> to vector<16x128xf32>
    %42 = arith.addf %40, %41 : vector<16x128xf32>
    %cst_21 = arith.constant 5.000000e-01 : f32
    %43 = vector.broadcast %cst_21 : f32 to vector<16x128xf32>
    %44 = arith.mulf %43, %42 : vector<16x128xf32>
    %cst_22 = arith.constant 0.707106769 : f32
    %45 = vector.broadcast %cst_22 : f32 to vector<16x128xf32>
    %46 = arith.mulf %42, %45 : vector<16x128xf32>
    %47 = math.erf %46 : vector<16x128xf32>
    %cst_23 = arith.constant 1.000000e+00 : f32
    %48 = vector.broadcast %cst_23 : f32 to vector<16x128xf32>
    %49 = arith.addf %48, %47 : vector<16x128xf32>
    %50 = arith.mulf %44, %49 : vector<16x128xf32>
    %c1_24 = arith.constant 1 : index
    %c0_25 = arith.constant 0 : index
    %c0_26 = arith.constant 0 : index
    %51 = vector.load %arg4[%c1_24, %c0_25, %c0_26] : memref<2x128x128xf32, #tpu.memory_space<vmem>>, vector<1x128x128xf32>
    %52 = vector.shape_cast %51 : vector<1x128x128xf32> to vector<128x128xf32>
    %cst_27 = arith.constant dense<0.000000e+00> : vector<16x128xf32>
    %53 = tpu.matmul %50, %52, %cst_27 {dimension_numbers = #tpu.dot_dimension_numbers<[1], [0], [0], [1], [0, 0, 1, 1], [], []>} : vector<16x128xf32>, vector<128x128xf32>, vector<16x128xf32> -> vector<16x128xf32>
    %54 = vector.broadcast %4 : vector<1x128xf32> to vector<16x128xf32>
    %55 = arith.addf %53, %54 : vector<16x128xf32>
    %56 = math.tanh %55 : vector<16x128xf32>
    %cst_28 = arith.constant 1.200000e+00 : f32
    %57 = vector.broadcast %cst_28 : f32 to vector<16x128xf32>
    %58 = arith.mulf %56, %57 : vector<16x128xf32>
    %c0_29 = arith.constant 0 : index
    %c0_30 = arith.constant 0 : index
    %59 = vector.load %arg5[%c0_29, %c0_30] : memref<16x128xf32, #tpu.memory_space<vmem>>, vector<16x128xf32>
    tpu.vector_store %arg5[%c0_29, %c0_30], %58 {strides = array<i32>} : memref<16x128xf32, #tpu.memory_space<vmem>>, vector<16x128xf32>,
    return
  }
  func.func @transform_0(%arg0: i32) -> (i32, i32) {
    %c0_i32 = arith.constant 0 : i32
    %c0_i32_0 = arith.constant 0 : i32
    return %arg0, %c0_i32 : i32, i32
  }
  func.func @transform_1(%arg0: i32) -> (i32, i32) {
    %c0_i32 = arith.constant 0 : i32
    %c0_i32_0 = arith.constant 0 : i32
    %c0_i32_1 = arith.constant 0 : i32
    return %c0_i32, %c0_i32_0 : i32, i32
  }
  func.func @transform_2(%arg0: i32) -> (i32, i32) {
    %c0_i32 = arith.constant 0 : i32
    %c0_i32_0 = arith.constant 0 : i32
    %c0_i32_1 = arith.constant 0 : i32
    return %c0_i32, %c0_i32_0 : i32, i32
  }
  func.func @transform_3(%arg0: i32) -> (i32, i32, i32) {
    %c0_i32 = arith.constant 0 : i32
    %c0_i32_0 = arith.constant 0 : i32
    %c0_i32_1 = arith.constant 0 : i32
    %c0_i32_2 = arith.constant 0 : i32
    return %c0_i32, %c0_i32_0, %c0_i32_1 : i32, i32, i32
  }
  func.func @transform_4(%arg0: i32) -> (i32, i32) {
    %c0_i32 = arith.constant 0 : i32
    %c0_i32_0 = arith.constant 0 : i32
    return %arg0, %c0_i32 : i32, i32
  }
}

</mosaic_0001>

<llo_original>
// kernel: trend_following_forward.1
$region0: #{trend_following_forward.1}
  #allocation0 [shape = 'u32[]', space=smem, size = 0x4, offset = 0x4, fixed_abs, tag = 'smem constant byte address 0x4 - core index']
  #allocation1 [shape = 'u32[144,128]{1,0:T(1,128)}', space=vmem, size = 0x12000, scoped, tag = 'internal scratch']
  %s0 = inlined_call_operand.hbm [shape: f32[16,32], index: 0, kind: input, shape index: {}]
  %s1 = inlined_call_operand.hbm [shape: f32[32,128], index: 1, kind: input, shape index: {}]
  %s2 = inlined_call_operand.hbm [shape: f32[8,128], index: 2, kind: input, shape index: {}]
  %s3 = inlined_call_operand.hbm [shape: f32[2,128,128], index: 3, kind: input, shape index: {}]
  %s4 = inlined_call_operand.vmem [shape: f32[16,128], index: 4, kind: output, shape index: {}]
  %s5 = sld [smem:[#allocation0]]
  $region42: #{trend_following_forward.1} parent=0
    _
  %s7 = ssub.s32 1, %s5
  %s8 = scalar_select 0, %s7, %s5
  $region1: #{trend_following_forward.1} parent=0
    #allocation2 [shape = 'u8[8192]{0}', space=vmem, size = 0x2000, scoped, tag = 'input window, operand 0, single buffered']
    #allocation3 [shape = 's32[1]{0}', space=sflag, size = 0x4, scoped, tag = 'scoped memory for trend_following_forward.1']
    #allocation4 [shape = 'u8[16384]{0}', space=vmem, size = 0x4000, scoped, tag = 'input window, operand 1, single buffered']
    #allocation5 [shape = 's32[1]{0}', space=sflag, size = 0x4, scoped, tag = 'scoped memory for trend_following_forward.1']
    #allocation6 [shape = 'u8[4096]{0}', space=vmem, size = 0x1000, scoped, tag = 'input window, operand 2, single buffered']
    #allocation7 [shape = 'u8[131072]{0}', space=vmem, size = 0x20000, scoped, tag = 'input window, operand 3, single buffered']
    #allocation8 [shape = 's32[1]{0}', space=sflag, size = 0x4, scoped, tag = 'scoped memory for trend_following_forward.1']
    %9 = vsyncpa [#allocation3], 0
    %10 = vsyncpa [#allocation5], 0
    %11 = vsyncpa [#allocation8], 0
    // Predicated region
    $region2: #{trend_following_forward.1} parent=1 // pred_check
      _
    $region3: #{trend_following_forward.1} parent=1 // pred_check_branch
      %13 = sbr.rel (0) target = $region5
    $region4: #{trend_following_forward.1} parent=1 // pred_region
      %s15 = ssub.s32 256, 256
      %16 = vsyncadd [#allocation3], %s15
      %s17 = sshll.u32 [#allocation2], 4
      %s18 = int_to_ptr.vmem [resolvable:$true] %s17
      %23 = dma.hbm_to_vmem [thread:$0]  %s0, 256, %s18, [#allocation3], 128, 128, 8
    $region5: #{trend_following_forward.1} parent=1 // pred_fallthru
      _
    // Predicated region
    $region6: #{trend_following_forward.1} parent=1 // pred_check
      _
    $region7: #{trend_following_forward.1} parent=1 // pred_check_branch
      %25 = sbr.rel (0) target = $region9
    $region8: #{trend_following_forward.1} parent=1 // pred_region
      %s27 = ssub.s32 512, 512
      %28 = vsyncadd [#allocation5], %s27
      %s29 = sshll.u32 [#allocation4], 4
      %s30 = int_to_ptr.vmem [resolvable:$true] %s29
      %35 = dma.hbm_to_vmem [thread:$0]  %s1, 512, %s30, [#allocation5], 128, 128, 8
    $region9: #{trend_following_forward.1} parent=1 // pred_fallthru
      _
    // Predicated region
    $region10: #{trend_following_forward.1} parent=1 // pred_check
      _
    $region11: #{trend_following_forward.1} parent=1 // pred_check_branch
      %37 = sbr.rel (0) target = $region13
    $region12: #{trend_following_forward.1} parent=1 // pred_region
      %s39 = ssub.s32 128, 128
      %40 = vsyncadd [#allocation5], %s39
      %s42 = sshll.u32 [#allocation6], 4
      %s43 = int_to_ptr.vmem [resolvable:$true] %s42
      %45 = dma.hbm_to_vmem [thread:$0]  %s2, 128, %s43, [#allocation5]
    $region13: #{trend_following_forward.1} parent=1 // pred_fallthru
      _
    // Predicated region
    $region14: #{trend_following_forward.1} parent=1 // pred_check
      _
    $region15: #{trend_following_forward.1} parent=1 // pred_check_branch
      %47 = sbr.rel (0) target = $region17
    $region16: #{trend_following_forward.1} parent=1 // pred_region
      %s49 = ssub.s32 4096, 4096
      %50 = vsyncadd [#allocation8], %s49
      %s51 = sshll.u32 [#allocation7], 4
      %s52 = int_to_ptr.vmem [resolvable:$true] %s51
      %57 = dma.hbm_to_vmem [thread:$0]  %s3, 4096, %s52, [#allocation8], 128, 128, 8
    $region17: #{trend_following_forward.1} parent=1 // pred_fallthru
      _
    // Predicated region
    $region18: #{trend_following_forward.1} parent=1 // pred_check
      _
    $region19: #{trend_following_forward.1} parent=1 // pred_check_branch
      %59 = sbr.rel (0) target = $region21
    $region20: #{trend_following_forward.1} parent=1 // pred_region
      %60 = dma.done [#allocation3], 256
    $region21: #{trend_following_forward.1} parent=1 // pred_fallthru
      _
    // Predicated region
    $region22: #{trend_following_forward.1} parent=1 // pred_check
      _
    $region23: #{trend_following_forward.1} parent=1 // pred_check_branch
      %62 = sbr.rel (0) target = $region25
    $region24: #{trend_following_forward.1} parent=1 // pred_region
      %63 = dma.done [#allocation5], 512
    $region25: #{trend_following_forward.1} parent=1 // pred_fallthru
      _
    // Predicated region
    $region26: #{trend_following_forward.1} parent=1 // pred_check
      _
    $region27: #{trend_following_forward.1} parent=1 // pred_check_branch
      %65 = sbr.rel (0) target = $region29
    $region28: #{trend_following_forward.1} parent=1 // pred_region
      %66 = dma.done [#allocation5], 128
    $region29: #{trend_following_forward.1} parent=1 // pred_fallthru
      _
    // Predicated region
    $region30: #{trend_following_forward.1} parent=1 // pred_check
      _
    $region31: #{trend_following_forward.1} parent=1 // pred_check_branch
      %68 = sbr.rel (0) target = $region33
    $region32: #{trend_following_forward.1} parent=1 // pred_region
      %69 = dma.done [#allocation8], 4096
    $region33: #{trend_following_forward.1} parent=1 // pred_fallthru
      _
    %v70 = vld [vmem:[#allocation6] sm:$0x1]
    %v71 = vld [vmem:[#allocation6 + $0x1] sm:$0x1]
    %v72 = vld [vmem:[#allocation6 + $0x2] sm:$0x1]
    %v73 = vld [vmem:[#allocation6 + $0x3] sm:$0x1]
    %v74 = vld [vmem:[#allocation6 + $0x4] sm:$0x1]
    %v75 = vld [vmem:[#allocation2] sm:$0xff]
    %v76 = vld [vmem:[#allocation2 + $0x8] sm:$0xff]
    %v77 = vld [vmem:[#allocation4] sm:$0xff]
    %v78 = vld [vmem:[#allocation4 + $0x8] sm:$0xff]
    %v79 = vld [vmem:[#allocation4 + $0x10] sm:$0xff]
    %v80 = vld [vmem:[#allocation4 + $0x18] sm:$0xff]
    %v81 = vlaneseq
    %v82 = vshrl.u32 %v81, 7
    %v83 = vsub.s32 0, %v82
    %v84 = vrot.slane %v70, %v83
    %vm85 = vcmask 261120
    %v87 = vsel %vm85, %v75, 0
    %v90 = vsel %vm85, %v76, 0
    %92 = vmatprep.subr.mxu0 0.0
    %93 = vmatpush1.msra.mxu0 %v77
    %94 = vmatprep.subr.mxu0 0.0
    %95 = vmatpush1.msra.mxu0 %v78
    %96 = vmatprep.subr.mxu0 0.0
    %97 = vmatpush1.msra.mxu0 %v79
    %98 = vmatprep.subr.mxu0 0.0
    %99 = vmatpush1.msra.mxu0 %v80
    %100 = vmatprep.subr.mxu0 0.0
    %101 = vmatpush1.msra.mxu0 0.0
    %102 = vmatprep.subr.mxu0 0.0
    %103 = vmatpush1.msra.mxu0 0.0
    %104 = vmatprep.subr.mxu0 0.0
    %105 = vmatpush1.msra.mxu0 0.0
    %106 = vmatprep.subr.mxu0 0.0
    %107 = vmatpush1.msra.mxu0 0.0
    %108 = vmatprep.subr.mxu0 0.0
    %109 = vmatpush1.msra.mxu0 0.0
    %110 = vmatprep.subr.mxu0 0.0
    %111 = vmatpush1.msra.mxu0 0.0
    %112 = vmatprep.subr.mxu0 0.0
    %113 = vmatpush1.msra.mxu0 0.0
    %114 = vmatprep.subr.mxu0 0.0
    %115 = vmatpush1.msra.mxu0 0.0
    %116 = vmatprep.subr.mxu0 0.0
    %117 = vmatpush1.msra.mxu0 0.0
    %118 = vmatprep.subr.mxu0 0.0
    %119 = vmatpush1.msra.mxu0 0.0
    %120 = vmatprep.subr.mxu0 0.0
    %121 = vmatpush1.msra.mxu0 0.0
    %122 = vmatprep.subr.mxu0 0.0
    %123 = vmatpush1.msra.mxu0 0.0
    %124 = vmatprep.subr.mxu0 0.0
    %125 = vmatpush1.msra.mxu0 0.0
    %126 = vmatprep.subr.mxu0 0.0
    %127 = vmatpush1.msra.mxu0 0.0
    %128 = vmatprep.subr.mxu0 0.0
    %129 = vmatpush1.msra.mxu0 0.0
    %130 = vmatprep.subr.mxu0 0.0
    %131 = vmatpush1.msra.mxu0 0.0
    %132 = vmatprep.subr.mxu0 0.0
    %133 = vmatpush1.msra.mxu0 0.0
    %134 = vmatprep.subr.mxu0 0.0
    %135 = vmatpush1.msra.mxu0 0.0
    %136 = vmatprep.subr.mxu0 0.0
    %137 = vmatpush1.msra.mxu0 0.0
    %138 = vmatprep.subr.mxu0 0.0
    %139 = vmatpush1.msra.mxu0 0.0
    %140 = vmatprep.subr.mxu0 0.0
    %141 = vmatpush1.msra.mxu0 0.0
    %142 = vmatprep.subr.mxu0 0.0
    %143 = vmatpush1.msra.mxu0 0.0
    %144 = vmatprep.subr.mxu0 0.0
    %145 = vmatpush1.msra.mxu0 0.0
    %146 = vmatprep.subr.mxu0 0.0
    %147 = vmatpush1.msra.mxu0 0.0
    %148 = vmatprep.subr.mxu0 0.0
    %149 = vmatpush1.msra.mxu0 0.0
    %150 = vmatprep.subr.mxu0 0.0
    %151 = vmatpush1.msra.mxu0 0.0
    %152 = vmatprep.subr.mxu0 0.0
    %153 = vmatpush1.msra.mxu0 0.0
    %154 = vmatprep.subr.mxu0 0.0
    %155 = vmatpush1.msra.mxu0 0.0
    %156 = vmatprep.mubr.f32.mxu0 0.0
    %157 = vmatmul.mubr.f32.gmra.mrb[0].mxu0 %v87
    %v158 = vpop.f32.mrb[0].mxu0
    %v159 = vadd.f32 %v84, %v158
    %v160 = vpop.f32.mrb[0].mxu0
    %161 = vmatprep.mubr.f32.mxu0 0.0
    %162 = vmatmul.mubr.f32.gmra.mrb[0].mxu0 %v90
    %v163 = vpop.f32.mrb[0].mxu0
    %v164 = vadd.f32 %v84, %v163
    %v165 = vpop.f32.mrb[0].mxu0
    %166 = vdwg.mxu0
    %v167 = vmul.f32 %v159, 0.5
    %v168 = vmul.f32 %v164, 0.5
    %v169 = vmul.f32 %v159, 0.70710677
    %v170 = vmul.f32 %v164, 0.70710677
    %v171 = verf.f32.pop %v169
    %v172 = verf.f32.pop %v170
    %v173 = vadd.f32 %v171, 1.0
    %v174 = vadd.f32 %v172, 1.0
    %v175 = vmul.f32 %v167, %v173
    %v176 = vmul.f32 %v168, %v174
    %177 = vadd.xlane.f32.xlu0 %v175
    %v178 = vpop.xlane.xlu0 %177
    %179 = vadd.xlane.f32.xlu0 %v176
    %v180 = vpop.xlane.xlu0 %179
    %v181 = vrcp.pop 128.0
    %v182 = vmul.f32 %v178, %v181
    %v183 = vmul.f32 %v180, %v181
    %v184 = vsub.f32 %v175, %v182
    %v185 = vsub.f32 %v176, %v183
    %v186 = vmul.f32 %v184, %v184
    %v187 = vmul.f32 %v185, %v185
    %188 = vadd.xlane.f32.xlu0 %v186
    %v189 = vpop.xlane.xlu0 %188
    %190 = vadd.xlane.f32.xlu0 %v187
    %v191 = vpop.xlane.xlu0 %190
    %v192 = vmul.f32 %v189, %v181
    %v193 = vmul.f32 %v191, %v181
    %v194 = vadd.f32 %v192, 1e-05
    %v195 = vadd.f32 %v193, 1e-05
    %v196 = vrsqrt.pop %v194
    %v197 = vrsqrt.pop %v195
    %v198 = vmul.f32 %v184, %v196
    %v199 = vmul.f32 %v185, %v197
    %v200 = vlaneseq
    %v201 = vshrl.u32 %v200, 7
    %v202 = vsub.s32 0, %v201
    %v203 = vrot.slane %v71, %v202
    %v204 = vmul.f32 %v198, %v203
    %v205 = vmul.f32 %v199, %v203
    %v206 = vlaneseq
    %v207 = vshrl.u32 %v206, 7
    %v208 = vsub.s32 0, %v207
    %v209 = vrot.slane %v72, %v208
    %v210 = vadd.f32 %v204, %v209
    %v211 = vadd.f32 %v205, %v209
    %v212 = vld [vmem:[#allocation7] sm:$0xff]
    %v213 = vld [vmem:[#allocation7 + $0x8] sm:$0xff]
    %v214 = vld [vmem:[#allocation7 + $0x10] sm:$0xff]
    %v215 = vld [vmem:[#allocation7 + $0x18] sm:$0xff]
    %v216 = vld [vmem:[#allocation7 + $0x20] sm:$0xff]
    %v217 = vld [vmem:[#allocation7 + $0x28] sm:$0xff]
    %v218 = vld [vmem:[#allocation7 + $0x30] sm:$0xff]
    %v219 = vld [vmem:[#allocation7 + $0x38] sm:$0xff]
    %v220 = vld [vmem:[#allocation7 + $0x40] sm:$0xff]
    %v221 = vld [vmem:[#allocation7 + $0x48] sm:$0xff]
    %v222 = vld [vmem:[#allocation7 + $0x50] sm:$0xff]
    %v223 = vld [vmem:[#allocation7 + $0x58] sm:$0xff]
    %v224 = vld [vmem:[#allocation7 + $0x60] sm:$0xff]
    %v225 = vld [vmem:[#allocation7 + $0x68] sm:$0xff]
    %v226 = vld [vmem:[#allocation7 + $0x70] sm:$0xff]
    %v227 = vld [vmem:[#allocation7 + $0x78] sm:$0xff]
    %v228 = vlaneseq
    %v229 = vshrl.u32 %v228, 7
    %v230 = vsub.s32 0, %v229
    %v231 = vrot.slane %v73, %v230
    %232 = vmatprep.subr.mxu0 0.0
    %233 = vmatpush1.msra.mxu0 %v212
    %234 = vmatprep.subr.mxu0 0.0
    %235 = vmatpush1.msra.mxu0 %v213
    %236 = vmatprep.subr.mxu0 0.0
    %237 = vmatpush1.msra.mxu0 %v214
    %238 = vmatprep.subr.mxu0 0.0
    %239 = vmatpush1.msra.mxu0 %v215
    %240 = vmatprep.subr.mxu0 0.0
    %241 = vmatpush1.msra.mxu0 %v216
    %242 = vmatprep.subr.mxu0 0.0
    %243 = vmatpush1.msra.mxu0 %v217
    %244 = vmatprep.subr.mxu0 0.0
    %245 = vmatpush1.msra.mxu0 %v218
    %246 = vmatprep.subr.mxu0 0.0
    %247 = vmatpush1.msra.mxu0 %v219
    %248 = vmatprep.subr.mxu0 0.0
    %249 = vmatpush1.msra.mxu0 %v220
    %250 = vmatprep.subr.mxu0 0.0
    %251 = vmatpush1.msra.mxu0 %v221
    %252 = vmatprep.subr.mxu0 0.0
    %253 = vmatpush1.msra.mxu0 %v222
    %254 = vmatprep.subr.mxu0 0.0
    %255 = vmatpush1.msra.mxu0 %v223
    %256 = vmatprep.subr.mxu0 0.0
    %257 = vmatpush1.msra.mxu0 %v224
    %258 = vmatprep.subr.mxu0 0.0
    %259 = vmatpush1.msra.mxu0 %v225
    %260 = vmatprep.subr.mxu0 0.0
    %261 = vmatpush1.msra.mxu0 %v226
    %262 = vmatprep.subr.mxu0 0.0
    %263 = vmatpush1.msra.mxu0 %v227
    %264 = vmatprep.subr.mxu0 0.0
    %265 = vmatpush1.msra.mxu0 0.0
    %266 = vmatprep.subr.mxu0 0.0
    %267 = vmatpush1.msra.mxu0 0.0
    %268 = vmatprep.subr.mxu0 0.0
    %269 = vmatpush1.msra.mxu0 0.0
    %270 = vmatprep.subr.mxu0 0.0
    %271 = vmatpush1.msra.mxu0 0.0
    %272 = vmatprep.subr.mxu0 0.0
    %273 = vmatpush1.msra.mxu0 0.0
    %274 = vmatprep.subr.mxu0 0.0
    %275 = vmatpush1.msra.mxu0 0.0
    %276 = vmatprep.subr.mxu0 0.0
    %277 = vmatpush1.msra.mxu0 0.0
    %278 = vmatprep.subr.mxu0 0.0
    %279 = vmatpush1.msra.mxu0 0.0
    %280 = vmatprep.subr.mxu0 0.0
    %281 = vmatpush1.msra.mxu0 0.0
    %282 = vmatprep.subr.mxu0 0.0
    %283 = vmatpush1.msra.mxu0 0.0
    %284 = vmatprep.subr.mxu0 0.0
    %285 = vmatpush1.msra.mxu0 0.0
    %286 = vmatprep.subr.mxu0 0.0
    %287 = vmatpush1.msra.mxu0 0.0
    %288 = vmatprep.subr.mxu0 0.0
    %289 = vmatpush1.msra.mxu0 0.0
    %290 = vmatprep.subr.mxu0 0.0
    %291 = vmatpush1.msra.mxu0 0.0
    %292 = vmatprep.subr.mxu0 0.0
    %293 = vmatpush1.msra.mxu0 0.0
    %294 = vmatprep.subr.mxu0 0.0
    %295 = vmatpush1.msra.mxu0 0.0
    %296 = vmatprep.mubr.f32.mxu0 0.0
    %297 = vmatmul.mubr.f32.gmra.mrb[0].mxu0 %v210
    %v298 = vpop.f32.mrb[0].mxu0
    %v299 = vadd.f32 %v231, %v298
    %v300 = vpop.f32.mrb[0].mxu0
    %301 = vmatprep.mubr.f32.mxu0 0.0
    %302 = vmatmul.mubr.f32.gmra.mrb[0].mxu0 %v211
    %v303 = vpop.f32.mrb[0].mxu0
    %v304 = vadd.f32 %v231, %v303
    %v305 = vpop.f32.mrb[0].mxu0
    %306 = vdwg.mxu0
    %v307 = vmul.f32 %v299, 0.5
    %v308 = vmul.f32 %v304, 0.5
    %v309 = vmul.f32 %v299, 0.70710677
    %v310 = vmul.f32 %v304, 0.70710677
    %v311 = verf.f32.pop %v309
    %v312 = verf.f32.pop %v310
    %v313 = vadd.f32 %v311, 1.0
    %v314 = vadd.f32 %v312, 1.0
    %v315 = vmul.f32 %v307, %v313
    %v316 = vmul.f32 %v308, %v314
    %s317 = scalar_lea.vmem [#allocation7], 128
    %v318 = vld [vmem:[%s317] sm:$0xff]
    %v319 = vld [vmem:[%s317 + $0x8] sm:$0xff]
    %v320 = vld [vmem:[%s317 + $0x10] sm:$0xff]
    %v321 = vld [vmem:[%s317 + $0x18] sm:$0xff]
    %v322 = vld [vmem:[%s317 + $0x20] sm:$0xff]
    %v323 = vld [vmem:[%s317 + $0x28] sm:$0xff]
    %v324 = vld [vmem:[%s317 + $0x30] sm:$0xff]
    %v325 = vld [vmem:[%s317 + $0x38] sm:$0xff]
    %v326 = vld [vmem:[%s317 + $0x40] sm:$0xff]
    %v327 = vld [vmem:[%s317 + $0x48] sm:$0xff]
    %v328 = vld [vmem:[%s317 + $0x50] sm:$0xff]
    %v329 = vld [vmem:[%s317 + $0x58] sm:$0xff]
    %v330 = vld [vmem:[%s317 + $0x60] sm:$0xff]
    %v331 = vld [vmem:[%s317 + $0x68] sm:$0xff]
    %v332 = vld [vmem:[%s317 + $0x70] sm:$0xff]
    %v333 = vld [vmem:[%s317 + $0x78] sm:$0xff]
    %v334 = vlaneseq
    %v335 = vshrl.u32 %v334, 7
    %v336 = vsub.s32 0, %v335
    %v337 = vrot.slane %v74, %v336
    %338 = vmatprep.subr.mxu0 0.0
    %339 = vmatpush1.msra.mxu0 %v318
    %340 = vmatprep.subr.mxu0 0.0
    %341 = vmatpush1.msra.mxu0 %v319
    %342 = vmatprep.subr.mxu0 0.0
    %343 = vmatpush1.msra.mxu0 %v320
    %344 = vmatprep.subr.mxu0 0.0
    %345 = vmatpush1.msra.mxu0 %v321
    %346 = vmatprep.subr.mxu0 0.0
    %347 = vmatpush1.msra.mxu0 %v322
    %348 = vmatprep.subr.mxu0 0.0
    %349 = vmatpush1.msra.mxu0 %v323
    %350 = vmatprep.subr.mxu0 0.0
    %351 = vmatpush1.msra.mxu0 %v324
    %352 = vmatprep.subr.mxu0 0.0
    %353 = vmatpush1.msra.mxu0 %v325
    %354 = vmatprep.subr.mxu0 0.0
    %355 = vmatpush1.msra.mxu0 %v326
    %356 = vmatprep.subr.mxu0 0.0
    %357 = vmatpush1.msra.mxu0 %v327
    %358 = vmatprep.subr.mxu0 0.0
    %359 = vmatpush1.msra.mxu0 %v328
    %360 = vmatprep.subr.mxu0 0.0
    %361 = vmatpush1.msra.mxu0 %v329
    %362 = vmatprep.subr.mxu0 0.0
    %363 = vmatpush1.msra.mxu0 %v330
    %364 = vmatprep.subr.mxu0 0.0
    %365 = vmatpush1.msra.mxu0 %v331
    %366 = vmatprep.subr.mxu0 0.0
    %367 = vmatpush1.msra.mxu0 %v332
    %368 = vmatprep.subr.mxu0 0.0
    %369 = vmatpush1.msra.mxu0 %v333
    %370 = vmatprep.subr.mxu0 0.0
    %371 = vmatpush1.msra.mxu0 0.0
    %372 = vmatprep.subr.mxu0 0.0
    %373 = vmatpush1.msra.mxu0 0.0
    %374 = vmatprep.subr.mxu0 0.0
    %375 = vmatpush1.msra.mxu0 0.0
    %376 = vmatprep.subr.mxu0 0.0
    %377 = vmatpush1.msra.mxu0 0.0
    %378 = vmatprep.subr.mxu0 0.0
    %379 = vmatpush1.msra.mxu0 0.0
    %380 = vmatprep.subr.mxu0 0.0
    %381 = vmatpush1.msra.mxu0 0.0
    %382 = vmatprep.subr.mxu0 0.0
    %383 = vmatpush1.msra.mxu0 0.0
    %384 = vmatprep.subr.mxu0 0.0
    %385 = vmatpush1.msra.mxu0 0.0
    %386 = vmatprep.subr.mxu0 0.0
    %387 = vmatpush1.msra.mxu0 0.0
    %388 = vmatprep.subr.mxu0 0.0
    %389 = vmatpush1.msra.mxu0 0.0
    %390 = vmatprep.subr.mxu0 0.0
    %391 = vmatpush1.msra.mxu0 0.0
    %392 = vmatprep.subr.mxu0 0.0
    %393 = vmatpush1.msra.mxu0 0.0
    %394 = vmatprep.subr.mxu0 0.0
    %395 = vmatpush1.msra.mxu0 0.0
    %396 = vmatprep.subr.mxu0 0.0
    %397 = vmatpush1.msra.mxu0 0.0
    %398 = vmatprep.subr.mxu0 0.0
    %399 = vmatpush1.msra.mxu0 0.0
    %400 = vmatprep.subr.mxu0 0.0
    %401 = vmatpush1.msra.mxu0 0.0
    %402 = vmatprep.mubr.f32.mxu0 0.0
    %403 = vmatmul.mubr.f32.gmra.mrb[0].mxu0 %v315
    %v404 = vpop.f32.mrb[0].mxu0
    %v405 = vadd.f32 %v337, %v404
    %v406 = vpop.f32.mrb[0].mxu0
    %407 = vmatprep.mubr.f32.mxu0 0.0
    %408 = vmatmul.mubr.f32.gmra.mrb[0].mxu0 %v316
    %v409 = vpop.f32.mrb[0].mxu0
    %v410 = vadd.f32 %v337, %v409
    %v411 = vpop.f32.mrb[0].mxu0
    %412 = vdwg.mxu0
    %v413 = vtanh.pop %v405
    %v414 = vtanh.pop %v410
    %v415 = vmul.f32 %v413, 1.2
    %v416 = vmul.f32 %v414, 1.2
    %417 = vst [vmem:[%s4] sm:$0xff] %v415
    %418 = vst [vmem:[%s4 + $0x8] sm:$0xff] %v416
    // Predicated region
    $region34: #{trend_following_forward.1} parent=1 // pred_check
      _
    $region35: #{trend_following_forward.1} parent=1 // pred_check_branch
      %420 = sbr.rel (0) target = $region37
    $region36: #{trend_following_forward.1} parent=1 // pred_region
      _
    $region37: #{trend_following_forward.1} parent=1 // pred_fallthru
      _
    // Predicated region
    $region38: #{trend_following_forward.1} parent=1 // pred_check
      _
    $region39: #{trend_following_forward.1} parent=1 // pred_check_branch
      %422 = sbr.rel (0) target = $region41
    $region40: #{trend_following_forward.1} parent=1 // pred_region
      _
    $region41: #{trend_following_forward.1} parent=1 // pred_fallthru
      _
    %423 = vsyncpa [#allocation3], 1
    %424 = vsyncpa [#allocation5], 1
    %425 = vsyncpa [#allocation8], 1

</llo_original>
